<compile_context>
chip_gen: v7x
topology: tpu7x:2x2x1
jax: 0.10.0
libtpu: 0.0.40
codegen_flags: <defaults>
</compile_context>

<pallas_src>
import jax
import jax.numpy as jnp
from jax import lax
from jax.experimental import pallas as pl
from jax.experimental.pallas import tpu as pltpu


def _round_up(x, m):
    return (x + m - 1) // m * m


def _linear_relu_kernel(x_ref, w_ref, b_ref, o_ref):
    """Single-K-block variant: full contraction in one MXU dot + fused epilogue.

    x_ref: (tm, K)   activation tile
    w_ref: (tn, K)   weight tile, PyTorch layout (contracted on dim 1 of both)
    b_ref: (1, tn)   bias tile
    o_ref: (tm, tn)  output tile
    """
    acc = lax.dot_general(
        x_ref[...], w_ref[...],
        dimension_numbers=(((1,), (1,)), ((), ())),      # x @ W.T
        preferred_element_type=jnp.float32)
    acc = acc + b_ref[...].astype(jnp.float32)
    o_ref[...] = jnp.maximum(acc, 0.0).astype(o_ref.dtype)


def _linear_relu_kernel_ktiled(x_ref, w_ref, b_ref, o_ref, acc_ref):
    """K-tiled variant: f32 accumulator scratch, bias+ReLU epilogue on last K step."""
    k = pl.program_id(2)

    @pl.when(k == 0)
    def _init():
        acc_ref[...] = jnp.zeros_like(acc_ref)

    acc_ref[...] += lax.dot_general(
        x_ref[...], w_ref[...],
        dimension_numbers=(((1,), (1,)), ((), ())),      # partial x @ W.T
        preferred_element_type=jnp.float32)

    @pl.when(k == pl.num_programs(2) - 1)
    def _finalize():
        acc = acc_ref[...] + b_ref[...].astype(jnp.float32)
        o_ref[...] = jnp.maximum(acc, 0.0).astype(o_ref.dtype)


def relu_layer(x, weight, bias, *, compute_dtype=None):
    """Forward of ReLULayer: relu(Linear(n_in, n_out)(x)).

    x:      (..., n_in)
    weight: (n_out, n_in)   (PyTorch nn.Linear convention, NOT transposed here)
    bias:   (n_out,)
    compute_dtype: optional MXU input dtype (e.g. jnp.bfloat16 on v6e/v7x);
                   accumulation and the bias/ReLU epilogue stay in f32 and the
                   output keeps x's original dtype.
    returns (..., n_out)
    """
    n_out, n_in = weight.shape
    orig_lead = x.shape[:-1]
    out_dtype = x.dtype
    x2 = x.reshape(-1, n_in)
    M = x2.shape[0]

    if compute_dtype is not None:
        x2 = x2.astype(compute_dtype)
        weight = weight.astype(compute_dtype)
    row_align = 16 if jnp.dtype(x2.dtype).itemsize < 4 else 8

    # ---------------- tile heuristics ----------------
    # M: single block for small batches; >=2 blocks for 256<M<=512 so both v7x
    # TensorCores get work; 512-row streaming tiles for large batches.
    if M <= 256:
        tm = M                      # full dim satisfies the (8,128) block rule
    elif M <= 512:
        tm = _round_up(-(-M // 2), row_align)
    else:
        tm = 512
    # N: full n_out when modest, otherwise 512 (multiple of 128 -> lane-dense
    # stores, bounded weight VMEM).
    tn = n_out if n_out <= 512 else 512
    # K: keep whole when it fits comfortably; only tile when the tile evenly
    # divides n_in (see invariant at the top of the file).
    if n_in <= 2048:
        tk = n_in
    else:
        for cand in (2048, 1024, 512, 256, 128):
            if n_in % cand == 0:
                tk = cand
                break
        else:
            # TODO(synk): zero-pad K for huge n_in not divisible by 128; until
            # then fall back to a single full-K block (correct, more VMEM).
            tk = n_in

    mb = pl.cdiv(M, tm)
    nb = pl.cdiv(n_out, tn)
    kb = n_in // tk                 # tk divides n_in by construction

    b2 = bias.reshape(1, n_out)

    cost = pl.CostEstimate(
        flops=2 * M * n_in * n_out,
        transcendentals=0,
        bytes_accessed=(x2.size * x2.dtype.itemsize
                        + weight.size * weight.dtype.itemsize
                        + b2.size * b2.dtype.itemsize
                        + M * n_out * jnp.dtype(out_dtype).itemsize),
    )

    if kb == 1:
        kernel = _linear_relu_kernel
        dims = ("parallel", "parallel")
        grid_spec = pltpu.PrefetchScalarGridSpec(
            num_scalar_prefetch=0,
            grid=(mb, nb),
            in_specs=[
                pl.BlockSpec((tm, n_in), lambda i, j: (i, 0)),
                pl.BlockSpec((tn, n_in), lambda i, j: (j, 0)),
                pl.BlockSpec((1, tn), lambda i, j: (0, j)),
            ],
            out_specs=pl.BlockSpec((tm, tn), lambda i, j: (i, j)),
        )
    else:
        kernel = _linear_relu_kernel_ktiled
        dims = ("parallel", "parallel", "arbitrary")
        grid_spec = pltpu.PrefetchScalarGridSpec(
            num_scalar_prefetch=0,
            grid=(mb, nb, kb),
            in_specs=[
                pl.BlockSpec((tm, tk), lambda i, j, k: (i, k)),
                pl.BlockSpec((tn, tk), lambda i, j, k: (j, k)),
                pl.BlockSpec((1, tn), lambda i, j, k: (0, j)),
            ],
            out_specs=pl.BlockSpec((tm, tn), lambda i, j, k: (i, j)),
            scratch_shapes=[pltpu.VMEM((tm, tn), jnp.float32)],
        )

    out = pl.pallas_call(
        kernel,
        out_shape=jax.ShapeDtypeStruct((M, n_out), out_dtype),
        grid_spec=grid_spec,
        compiler_params=pltpu.CompilerParams(
            dimension_semantics=dims,
            vmem_limit_bytes=48 * 1024 * 1024,
        ),
        cost_estimate=cost,
    )(x2, weight, b2)

    return out.reshape(*orig_lead, n_out)


def _reference(x, weight, bias):
    return jnp.maximum(jnp.dot(x, weight.T) + bias, 0.0)


if __name__ == "__main__":
    def make_inputs(key, batch, n_in, n_out):
        kx, kw, kb = jax.random.split(key, 3)
        bound = 1.0 / (n_in ** 0.5)
        x = jax.random.normal(kx, (batch, n_in), dtype=jnp.float32)
        w = jax.random.uniform(kw, (n_out, n_in), jnp.float32, -bound, bound)
        b = jax.random.uniform(kb, (n_out,), jnp.float32, -bound, bound)
        return x, w, b

    fwd = jax.jit(relu_layer, static_argnames=("compute_dtype",))
    k1, k2, k3 = jax.random.split(jax.random.PRNGKey(0), 3)

    # 1) Primary small case matching the module spec: ReLULayer(32, 32), batch=8.
    x, w, b = make_inputs(k1, 8, 32, 32)
    out = jax.block_until_ready(fwd(x, w, b))
    ref = _reference(x, w, b)
    assert out.shape == (8, 32), out.shape
    assert jnp.allclose(out, ref, atol=1e-4, rtol=1e-4), float(jnp.abs(out - ref).max())

    # 2) Ragged-M (no wrapper pad/slice) + N-tiling + 2 parallel M-blocks.
    #    Loose tolerance covers MXU f32-via-bf16-pass differences vs XLA's dot.
    x, w, b = make_inputs(k2, 300, 256, 640)
    out = jax.block_until_ready(fwd(x, w, b))
    ref = _reference(x, w, b)
    assert out.shape == (300, 640), out.shape
    assert jnp.allclose(out, ref, atol=2e-2, rtol=2e-2), float(jnp.abs(out - ref).max())

    # 3) K-tiled accumulator path with bf16 MXU inputs / f32 accumulation.
    x, w, b = make_inputs(k3, 64, 4096, 256)
    out = jax.block_until_ready(fwd(x, w, b, compute_dtype=jnp.bfloat16))
    ref = jnp.maximum(
        jnp.dot(x.astype(jnp.bfloat16), w.astype(jnp.bfloat16).T,
                preferred_element_type=jnp.float32) + b, 0.0)
    assert out.shape == (64, 256), out.shape
    assert jnp.allclose(out, ref, atol=2e-3, rtol=2e-3), float(jnp.abs(out - ref).max())

    print("KERNEL_OK")
</pallas_src>

<mosaic_0001>
module attributes {stable_mosaic.version = 11 : i64} {
  func.func @_linear_relu_kernel(%arg0: i32, %arg1: i32, %arg2: memref<8x32xf32, #tpu.memory_space<vmem>>, %arg3: memref<32x32xf32, #tpu.memory_space<vmem>>, %arg4: memref<1x32xf32, #tpu.memory_space<vmem>>, %arg5: memref<8x32xf32, #tpu.memory_space<vmem>>) attributes {dimension_semantics = [#tpu.dimension_semantics<parallel>, #tpu.dimension_semantics<parallel>], iteration_bounds = array<i64: 1, 1>, scalar_prefetch = 0 : i64, scratch_operands = 0 : i64, tpu.core_type = #tpu.core_type<tc>, window_params = [{transform_indices = @transform_0, window_bounds = array<i64: 8, 32>}, {transform_indices = @transform_1, window_bounds = array<i64: 32, 32>}, {transform_indices = @transform_2, window_bounds = array<i64: 1, 32>}, {transform_indices = @transform_3, window_bounds = array<i64: 8, 32>}]} {
    %c0 = arith.constant 0 : index
    %c0_0 = arith.constant 0 : index
    %0 = vector.load %arg2[%c0, %c0_0] : memref<8x32xf32, #tpu.memory_space<vmem>>, vector<8x32xf32>
    %c0_1 = arith.constant 0 : index
    %c0_2 = arith.constant 0 : index
    %1 = vector.load %arg3[%c0_1, %c0_2] : memref<32x32xf32, #tpu.memory_space<vmem>>, vector<32x32xf32>
    %cst = arith.constant dense<0.000000e+00> : vector<8x32xf32>
    %2 = tpu.matmul %0, %1, %cst {dimension_numbers = #tpu.dot_dimension_numbers<[1], [1], [0], [0], [0, 0, 1, 0], [], []>} : vector<8x32xf32>, vector<32x32xf32>, vector<8x32xf32> -> vector<8x32xf32>
    %c0_3 = arith.constant 0 : index
    %c0_4 = arith.constant 0 : index
    %3 = vector.load %arg4[%c0_3, %c0_4] : memref<1x32xf32, #tpu.memory_space<vmem>>, vector<1x32xf32>
    %4 = vector.broadcast %3 : vector<1x32xf32> to vector<8x32xf32>
    %5 = arith.addf %2, %4 : vector<8x32xf32>
    %cst_5 = arith.constant 0.000000e+00 : f32
    %6 = vector.broadcast %cst_5 : f32 to vector<8x32xf32>
    %7 = arith.maximumf %5, %6 : vector<8x32xf32>
    %c0_6 = arith.constant 0 : index
    %c0_7 = arith.constant 0 : index
    %8 = vector.load %arg5[%c0_6, %c0_7] : memref<8x32xf32, #tpu.memory_space<vmem>>, vector<8x32xf32>
    tpu.vector_store %arg5[%c0_6, %c0_7], %7 {strides = array<i32>} : memref<8x32xf32, #tpu.memory_space<vmem>>, vector<8x32xf32>,
    return
  }
  func.func @transform_0(%arg0: i32, %arg1: i32) -> (i32, i32) {
    %c0_i32 = arith.constant 0 : i32
    %c0_i32_0 = arith.constant 0 : i32
    return %arg0, %c0_i32 : i32, i32
  }
  func.func @transform_1(%arg0: i32, %arg1: i32) -> (i32, i32) {
    %c0_i32 = arith.constant 0 : i32
    %c0_i32_0 = arith.constant 0 : i32
    return %arg1, %c0_i32 : i32, i32
  }
  func.func @transform_2(%arg0: i32, %arg1: i32) -> (i32, i32) {
    %c0_i32 = arith.constant 0 : i32
    %c0_i32_0 = arith.constant 0 : i32
    return %c0_i32, %arg1 : i32, i32
  }
  func.func @transform_3(%arg0: i32, %arg1: i32) -> (i32, i32) {
    %c0_i32 = arith.constant 0 : i32
    return %arg0, %arg1 : i32, i32
  }
}

</mosaic_0001>

<llo_original>
// kernel: relu_layer.1
$region0: #{relu_layer.1}
  #allocation0 [shape = 'u32[]', space=smem, size = 0x4, offset = 0x4, fixed_abs, tag = 'smem constant byte address 0x4 - core index']
  #allocation1 [shape = 'u32[144,128]{1,0:T(1,128)}', space=vmem, size = 0x12000, scoped, tag = 'internal scratch']
  %s0 = inlined_call_operand.hbm [shape: f32[8,32], index: 0, kind: input, shape index: {}]
  %s1 = inlined_call_operand.hbm [shape: f32[32,32], index: 1, kind: input, shape index: {}]
  %s2 = inlined_call_operand.vmem [shape: f32[1,32], index: 2, kind: input, shape index: {}]
  %s3 = inlined_call_operand.hbm [shape: f32[8,32], index: 3, kind: output, shape index: {}]
  %s4 = sld [smem:[#allocation0]]
  $region30: #{relu_layer.1} parent=0
    _
  %s6 = ssub.s32 1, %s4
  %s7 = scalar_select 0, %s6, %s4
  $region1: #{relu_layer.1} parent=0
    #allocation2 [shape = 'u8[4096]{0}', space=vmem, size = 0x1000, scoped, tag = 'input window, operand 0, single buffered']
    #allocation3 [shape = 's32[1]{0}', space=sflag, size = 0x4, scoped, tag = 'scoped memory for relu_layer.1']
    #allocation4 [shape = 's32[1]{0}', space=sflag, size = 0x4, scoped, tag = 'scoped memory for relu_layer.1']
    #allocation5 [shape = 'u8[16384]{0}', space=vmem, size = 0x4000, scoped, tag = 'input window, operand 1, single buffered']
    #allocation6 [shape = 's32[1]{0}', space=sflag, size = 0x4, scoped, tag = 'scoped memory for relu_layer.1']
    #allocation7 [shape = 'u8[4096]{0}', space=vmem, size = 0x1000, scoped, tag = 'output window, operand 0, single buffered']
    %8 = vsyncpa [#allocation3], 0
    %9 = vsyncpa [#allocation6], 0
    %10 = vsyncpa [#allocation4], 0
    // Predicated region
    $region2: #{relu_layer.1} parent=1 // pred_check
      _
    $region3: #{relu_layer.1} parent=1 // pred_check_branch
      %12 = sbr.rel (0) target = $region5
    $region4: #{relu_layer.1} parent=1 // pred_region
      %s14 = ssub.s32 128, 128
      %15 = vsyncadd [#allocation3], %s14
      %s17 = sshll.u32 [#allocation2], 4
      %s18 = int_to_ptr.vmem [resolvable:$true] %s17
      %20 = dma.hbm_to_vmem [thread:$0]  %s0, 128, %s18, [#allocation3]
    $region5: #{relu_layer.1} parent=1 // pred_fallthru
      _
    // Predicated region
    $region6: #{relu_layer.1} parent=1 // pred_check
      _
    $region7: #{relu_layer.1} parent=1 // pred_check_branch
      %22 = sbr.rel (0) target = $region9
    $region8: #{relu_layer.1} parent=1 // pred_region
      %s24 = ssub.s32 512, 512
      %25 = vsyncadd [#allocation6], %s24
      %s26 = sshll.u32 [#allocation5], 4
      %s27 = int_to_ptr.vmem [resolvable:$true] %s26
      %32 = dma.hbm_to_vmem [thread:$0]  %s1, 512, %s27, [#allocation6], 128, 128, 8
    $region9: #{relu_layer.1} parent=1 // pred_fallthru
      _
    // Predicated region
    $region10: #{relu_layer.1} parent=1 // pred_check
      _
    $region11: #{relu_layer.1} parent=1 // pred_check_branch
      %34 = sbr.rel (0) target = $region13
    $region12: #{relu_layer.1} parent=1 // pred_region
      _
    $region13: #{relu_layer.1} parent=1 // pred_fallthru
      _
    // Predicated region
    $region14: #{relu_layer.1} parent=1 // pred_check
      _
    $region15: #{relu_layer.1} parent=1 // pred_check_branch
      %36 = sbr.rel (0) target = $region17
    $region16: #{relu_layer.1} parent=1 // pred_region
      %37 = dma.done [#allocation3], 128
    $region17: #{relu_layer.1} parent=1 // pred_fallthru
      _
    // Predicated region
    $region18: #{relu_layer.1} parent=1 // pred_check
      _
    $region19: #{relu_layer.1} parent=1 // pred_check_branch
      %39 = sbr.rel (0) target = $region21
    $region20: #{relu_layer.1} parent=1 // pred_region
      %40 = dma.done [#allocation6], 512
    $region21: #{relu_layer.1} parent=1 // pred_fallthru
      _
    %v41 = vld [vmem:[#allocation2] sm:$0xff]
    %v42 = vld [vmem:[#allocation5] sm:$0xff]
    %v43 = vld [vmem:[#allocation5 + $0x8] sm:$0xff]
    %v44 = vld [vmem:[#allocation5 + $0x10] sm:$0xff]
    %v45 = vld [vmem:[#allocation5 + $0x18] sm:$0xff]
    %v46 = vld [vmem:[%s2] sm:$0x1]
    %v48 = vlaneseq
    %v49 = vshrl.u32 %v48, 7
    %v50 = vsub.s32 0, %v49
    %v51 = vrot.slane %v46, %v50
    %vm53 = vcmask 261120
    %v55 = vsel %vm53, %v41, 0
    %v58 = vsel %vm53, %v42, 0
    %v61 = vsel %vm53, %v43, 0
    %v64 = vsel %vm53, %v44, 0
    %v67 = vsel %vm53, %v45, 0
    %69 = vmatprep.subr.mxu0 0.0
    %70 = vmatpush1.xpose.msra.mxu0 %v58
    %71 = vmatprep.subr.mxu0 0.0
    %72 = vmatpush1.xpose.msra.mxu0 %v61
    %73 = vmatprep.subr.mxu0 0.0
    %74 = vmatpush1.xpose.msra.mxu0 %v64
    %75 = vmatprep.subr.mxu0 0.0
    %76 = vmatpush1.xpose.msra.mxu0 %v67
    %77 = vmatprep.subr.mxu0 0.0
    %78 = vmatpush1.xpose.msra.mxu0 0.0
    %79 = vmatprep.subr.mxu0 0.0
    %80 = vmatpush1.xpose.msra.mxu0 0.0
    %81 = vmatprep.subr.mxu0 0.0
    %82 = vmatpush1.xpose.msra.mxu0 0.0
    %83 = vmatprep.subr.mxu0 0.0
    %84 = vmatpush1.xpose.msra.mxu0 0.0
    %85 = vmatprep.subr.mxu0 0.0
    %86 = vmatpush1.xpose.msra.mxu0 0.0
    %87 = vmatprep.subr.mxu0 0.0
    %88 = vmatpush1.xpose.msra.mxu0 0.0
    %89 = vmatprep.subr.mxu0 0.0
    %90 = vmatpush1.xpose.msra.mxu0 0.0
    %91 = vmatprep.subr.mxu0 0.0
    %92 = vmatpush1.xpose.msra.mxu0 0.0
    %93 = vmatprep.subr.mxu0 0.0
    %94 = vmatpush1.xpose.msra.mxu0 0.0
    %95 = vmatprep.subr.mxu0 0.0
    %96 = vmatpush1.xpose.msra.mxu0 0.0
    %97 = vmatprep.subr.mxu0 0.0
    %98 = vmatpush1.xpose.msra.mxu0 0.0
    %99 = vmatprep.subr.mxu0 0.0
    %100 = vmatpush1.xpose.msra.mxu0 0.0
    %101 = vmatprep.subr.mxu0 0.0
    %102 = vmatpush1.xpose.msra.mxu0 0.0
    %103 = vmatprep.subr.mxu0 0.0
    %104 = vmatpush1.xpose.msra.mxu0 0.0
    %105 = vmatprep.subr.mxu0 0.0
    %106 = vmatpush1.xpose.msra.mxu0 0.0
    %107 = vmatprep.subr.mxu0 0.0
    %108 = vmatpush1.xpose.msra.mxu0 0.0
    %109 = vmatprep.subr.mxu0 0.0
    %110 = vmatpush1.xpose.msra.mxu0 0.0
    %111 = vmatprep.subr.mxu0 0.0
    %112 = vmatpush1.xpose.msra.mxu0 0.0
    %113 = vmatprep.subr.mxu0 0.0
    %114 = vmatpush1.xpose.msra.mxu0 0.0
    %115 = vmatprep.subr.mxu0 0.0
    %116 = vmatpush1.xpose.msra.mxu0 0.0
    %117 = vmatprep.subr.mxu0 0.0
    %118 = vmatpush1.xpose.msra.mxu0 0.0
    %119 = vmatprep.subr.mxu0 0.0
    %120 = vmatpush1.xpose.msra.mxu0 0.0
    %121 = vmatprep.subr.mxu0 0.0
    %122 = vmatpush1.xpose.msra.mxu0 0.0
    %123 = vmatprep.subr.mxu0 0.0
    %124 = vmatpush1.xpose.msra.mxu0 0.0
    %125 = vmatprep.subr.mxu0 0.0
    %126 = vmatpush1.xpose.msra.mxu0 0.0
    %127 = vmatprep.subr.mxu0 0.0
    %128 = vmatpush1.xpose.msra.mxu0 0.0
    %129 = vmatprep.subr.mxu0 0.0
    %130 = vmatpush1.xpose.msra.mxu0 0.0
    %131 = vmatprep.subr.mxu0 0.0
    %132 = vmatpush1.xpose.msra.mxu0 0.0
    %133 = vmatprep.mubr.f32.mxu0 0.0
    %134 = vmatmul.mubr.f32.gmra.mrb[0].mxu0 %v55
    %v135 = vpop.f32.mrb[0].mxu0
    %v136 = vadd.f32 %v51, %v135
    %v137 = vpop.f32.mrb[0].mxu0
    %138 = vdwg.mxu0
    %v139 = vmax.f32 %v136, 0.0
    %140 = vst.msk [vmem:[#allocation7] sm:$0xff] %vm53, %v139
    // Predicated region
    $region22: #{relu_layer.1} parent=1 // pred_check
      _
    $region23: #{relu_layer.1} parent=1 // pred_check_branch
      %142 = sbr.rel (0) target = $region25
    $region24: #{relu_layer.1} parent=1 // pred_region
      %s144 = ssub.s32 128, 128
      %145 = vsyncadd [#allocation4], %s144
      %s147 = sshll.u32 [#allocation7], 4
      %s148 = int_to_ptr.vmem [resolvable:$true] %s147
      %150 = dma.vmem_to_hbm [thread:$0]  %s148, 128, %s3, [#allocation4]
    $region25: #{relu_layer.1} parent=1 // pred_fallthru
      _
    // Predicated region
    $region26: #{relu_layer.1} parent=1 // pred_check
      _
    $region27: #{relu_layer.1} parent=1 // pred_check_branch
      %152 = sbr.rel (0) target = $region29
    $region28: #{relu_layer.1} parent=1 // pred_region
      %153 = dma.done [#allocation4], 128
    $region29: #{relu_layer.1} parent=1 // pred_fallthru
      _
    %154 = vsyncpa [#allocation3], 1
    %155 = vsyncpa [#allocation6], 1
    %156 = vsyncpa [#allocation4], 1

</llo_original>
